<compile_context>
chip_gen: v7x
topology: tpu7x:2x2x1
jax: 0.10.0
libtpu: 0.0.40
codegen_flags: <defaults>
</compile_context>

<pallas_src>
import jax
import jax.numpy as jnp
from jax import lax
from jax.experimental import pallas as pl
from jax.experimental.pallas import tpu as pltpu


def _make_projector_kernel(num_layers, compute_dtype):
    """Kernel that pushes one (TM, in_dim) x-tile through the full stack."""

    def kernel(x_ref, *refs):
        w_refs = refs[:num_layers]
        o_ref = refs[num_layers]
        h = x_ref[...]
        for li, w_ref in enumerate(w_refs):
            # (TM, in) . (out, in)^T -> (TM, out); contract last dims, f32 acc.
            h = lax.dot_general(
                h,
                w_ref[...],
                dimension_numbers=(((1,), (1,)), ((), ())),
                preferred_element_type=jnp.float32,
            )
            if li + 1 < num_layers:
                # Keep intermediates in the compute dtype so bf16 inputs stay
                # on the fast MXU path for the remaining layers.
                h = h.astype(compute_dtype)
        o_ref[...] = h.astype(o_ref.dtype)

    return kernel


def projector_forward(x, weights, *, tm=None,
                      vmem_budget_bytes=24 * 1024 * 1024):
    """Forward pass of Projector.

    x:       (..., input_dim) activations.
    weights: list of PyTorch-style (out_features, in_features) matrices,
             weights[0]: (output_dim, input_dim), rest (output_dim, output_dim).
    """
    num_layers = len(weights)
    assert num_layers >= 1

    orig_shape = x.shape
    in_dim = orig_shape[-1]
    x2d = x.reshape(-1, in_dim)
    n = x2d.shape[0]
    out_dim = weights[-1].shape[0]
    itemsize = jnp.dtype(x.dtype).itemsize

    weight_bytes = sum(int(w.size) * jnp.dtype(w.dtype).itemsize for w in weights)

    if tm is None:
        # Bytes that scale with the M-tile: double-buffered x and out tiles
        # plus one f32 intermediate of width out_dim.
        per_row = 2 * in_dim * itemsize + 2 * out_dim * itemsize + out_dim * 4
        avail = max(vmem_budget_bytes - 2 * weight_bytes, per_row * 8)
        tm = int(avail // per_row)
        tm = max(8, min(tm, 1024))
        tm = (tm // 8) * 8  # sublane alignment when tiling
    if tm >= n:
        tm = n  # single full-extent tile (always a legal block shape)
    grid = (pl.cdiv(n, tm),)

    # Rough VMEM footprint -> explicit scoped-VMEM limit; capped at 48 MiB so
    # it is also valid on v7x (64 MiB physical) while raising v5e/v6e defaults.
    est = (2 * tm * in_dim * itemsize + 2 * tm * out_dim * itemsize
           + tm * out_dim * 4 + 2 * weight_bytes)
    vmem_limit = int(min(max(est * 5 // 4, 32 * 1024 * 1024), 48 * 1024 * 1024))

    in_specs = [pl.BlockSpec((tm, in_dim), lambda i: (i, 0))]
    for w in weights:
        # Full weight resident in VMEM; constant index_map -> fetched once.
        in_specs.append(pl.BlockSpec(w.shape, lambda i: (0, 0)))

    kernel = _make_projector_kernel(num_layers, x.dtype)

    # Advisory cost estimate for the XLA scheduler.
    dims = [w.shape for w in weights]
    flops = 2 * n * sum(o * i for (o, i) in dims)
    bytes_accessed = (n * in_dim + n * out_dim) * itemsize + weight_bytes
    cost = pl.CostEstimate(flops=flops, transcendentals=0,
                           bytes_accessed=bytes_accessed)

    out2d = pl.pallas_call(
        kernel,
        out_shape=jax.ShapeDtypeStruct((n, out_dim), x.dtype),
        grid=grid,
        in_specs=in_specs,
        out_specs=pl.BlockSpec((tm, out_dim), lambda i: (i, 0)),
        compiler_params=pltpu.CompilerParams(
            dimension_semantics=("parallel",),
            vmem_limit_bytes=vmem_limit,
        ),
        cost_estimate=cost,
    )(x2d, *weights)

    return out2d.reshape(orig_shape[:-1] + (out_dim,))


def init_projector_params(key, input_dim, output_dim, num_proj_layers,
                          dtype=jnp.float32):
    """nn.Linear-style init: uniform(-1/sqrt(fan_in), 1/sqrt(fan_in))."""
    dims = [(input_dim, output_dim)] + \
           [(output_dim, output_dim)] * (num_proj_layers - 1)
    weights = []
    for fan_in, fan_out in dims:
        key, sub = jax.random.split(key)
        bound = 1.0 / (fan_in ** 0.5)
        # PyTorch stores Linear weight as (out_features, in_features).
        w = jax.random.uniform(sub, (fan_out, fan_in), dtype,
                               minval=-bound, maxval=bound)
        weights.append(w)
    return weights


if __name__ == "__main__":
    # Small but lane/sublane-aligned shapes consistent with the module
    # (module defaults are 2048 -> 512, 3 layers; scaled down here).
    batch, input_dim, output_dim, num_layers = 16, 256, 128, 3

    key = jax.random.PRNGKey(0)
    key, xk = jax.random.split(key)
    x = jax.random.normal(xk, (batch, input_dim), jnp.float32)
    weights = init_projector_params(key, input_dim, output_dim, num_layers)

    y = jax.block_until_ready(projector_forward(x, weights))

    # Pure-JAX reference (same (out, in) weight layout as PyTorch nn.Linear).
    ref = x
    for w in weights:
        ref = ref @ w.T
    assert y.shape == (batch, output_dim)
    assert jnp.allclose(y, ref, atol=1e-4, rtol=1e-4), \
        float(jnp.max(jnp.abs(y - ref)))

    print("KERNEL_OK")
</pallas_src>

<mosaic_0001>
module attributes {stable_mosaic.version = 11 : i64} {
  func.func @kernel(%arg0: i32, %arg1: memref<16x256xf32, #tpu.memory_space<vmem>>, %arg2: memref<128x256xf32, #tpu.memory_space<vmem>>, %arg3: memref<128x128xf32, #tpu.memory_space<vmem>>, %arg4: memref<128x128xf32, #tpu.memory_space<vmem>>, %arg5: memref<16x128xf32, #tpu.memory_space<vmem>>) attributes {dimension_semantics = [#tpu.dimension_semantics<parallel>], iteration_bounds = array<i64: 1>, scalar_prefetch = 0 : i64, scratch_operands = 0 : i64, tpu.core_type = #tpu.core_type<tc>, window_params = [{transform_indices = @transform_0, window_bounds = array<i64: 16, 256>}, {pipeline_mode = #tpu.pipeline_mode<synchronous>, transform_indices = @transform_1, window_bounds = array<i64: 128, 256>}, {pipeline_mode = #tpu.pipeline_mode<synchronous>, transform_indices = @transform_2, window_bounds = array<i64: 128, 128>}, {pipeline_mode = #tpu.pipeline_mode<synchronous>, transform_indices = @transform_3, window_bounds = array<i64: 128, 128>}, {transform_indices = @transform_4, window_bounds = array<i64: 16, 128>}]} {
    %c0 = arith.constant 0 : index
    %c0_0 = arith.constant 0 : index
    %0 = vector.load %arg1[%c0, %c0_0] : memref<16x256xf32, #tpu.memory_space<vmem>>, vector<16x256xf32>
    %c0_1 = arith.constant 0 : index
    %c0_2 = arith.constant 0 : index
    %1 = vector.load %arg2[%c0_1, %c0_2] : memref<128x256xf32, #tpu.memory_space<vmem>>, vector<128x256xf32>
    %cst = arith.constant dense<0.000000e+00> : vector<16x128xf32>
    %2 = tpu.matmul %0, %1, %cst {dimension_numbers = #tpu.dot_dimension_numbers<[1], [1], [0], [0], [0, 0, 1, 0], [], []>} : vector<16x256xf32>, vector<128x256xf32>, vector<16x128xf32> -> vector<16x128xf32>
    %c0_3 = arith.constant 0 : index
    %c0_4 = arith.constant 0 : index
    %3 = vector.load %arg3[%c0_3, %c0_4] : memref<128x128xf32, #tpu.memory_space<vmem>>, vector<128x128xf32>
    %cst_5 = arith.constant dense<0.000000e+00> : vector<16x128xf32>
    %4 = tpu.matmul %2, %3, %cst_5 {dimension_numbers = #tpu.dot_dimension_numbers<[1], [1], [0], [0], [0, 0, 1, 0], [], []>} : vector<16x128xf32>, vector<128x128xf32>, vector<16x128xf32> -> vector<16x128xf32>
    %c0_6 = arith.constant 0 : index
    %c0_7 = arith.constant 0 : index
    %5 = vector.load %arg4[%c0_6, %c0_7] : memref<128x128xf32, #tpu.memory_space<vmem>>, vector<128x128xf32>
    %cst_8 = arith.constant dense<0.000000e+00> : vector<16x128xf32>
    %6 = tpu.matmul %4, %5, %cst_8 {dimension_numbers = #tpu.dot_dimension_numbers<[1], [1], [0], [0], [0, 0, 1, 0], [], []>} : vector<16x128xf32>, vector<128x128xf32>, vector<16x128xf32> -> vector<16x128xf32>
    %c0_9 = arith.constant 0 : index
    %c0_10 = arith.constant 0 : index
    %7 = vector.load %arg5[%c0_9, %c0_10] : memref<16x128xf32, #tpu.memory_space<vmem>>, vector<16x128xf32>
    tpu.vector_store %arg5[%c0_9, %c0_10], %6 {strides = array<i32>} : memref<16x128xf32, #tpu.memory_space<vmem>>, vector<16x128xf32>,
    return
  }
  func.func @transform_0(%arg0: i32) -> (i32, i32) {
    %c0_i32 = arith.constant 0 : i32
    %c0_i32_0 = arith.constant 0 : i32
    return %arg0, %c0_i32 : i32, i32
  }
  func.func @transform_1(%arg0: i32) -> (i32, i32) {
    %c0_i32 = arith.constant 0 : i32
    %c0_i32_0 = arith.constant 0 : i32
    %c0_i32_1 = arith.constant 0 : i32
    return %c0_i32, %c0_i32_0 : i32, i32
  }
  func.func @transform_2(%arg0: i32) -> (i32, i32) {
    %c0_i32 = arith.constant 0 : i32
    %c0_i32_0 = arith.constant 0 : i32
    %c0_i32_1 = arith.constant 0 : i32
    return %c0_i32, %c0_i32_0 : i32, i32
  }
  func.func @transform_3(%arg0: i32) -> (i32, i32) {
    %c0_i32 = arith.constant 0 : i32
    %c0_i32_0 = arith.constant 0 : i32
    %c0_i32_1 = arith.constant 0 : i32
    return %c0_i32, %c0_i32_0 : i32, i32
  }
  func.func @transform_4(%arg0: i32) -> (i32, i32) {
    %c0_i32 = arith.constant 0 : i32
    %c0_i32_0 = arith.constant 0 : i32
    return %arg0, %c0_i32 : i32, i32
  }
}

</mosaic_0001>

<llo_original>
// kernel: tpu_custom_call.1
$region0: #{tpu_custom_call.1}
  #allocation0 [shape = 'u32[]', space=smem, size = 0x4, offset = 0x4, fixed_abs, tag = 'smem constant byte address 0x4 - core index']
  #allocation1 [shape = 'u32[144,128]{1,0:T(1,128)}', space=vmem, size = 0x12000, scoped, tag = 'internal scratch']
  %s0 = inlined_call_operand.hbm [shape: f32[16,256], index: 0, kind: input, shape index: {}]
  %s1 = inlined_call_operand.hbm [shape: f32[128,256], index: 1, kind: input, shape index: {}]
  %s2 = inlined_call_operand.hbm [shape: f32[128,128], index: 2, kind: input, shape index: {}]
  %s3 = inlined_call_operand.hbm [shape: f32[128,128], index: 3, kind: input, shape index: {}]
  %s4 = inlined_call_operand.hbm [shape: f32[16,128], index: 4, kind: output, shape index: {}]
  %s5 = sld [smem:[#allocation0]]
  $region42: #{tpu_custom_call.1} parent=0
    _
  %s7 = ssub.s32 1, %s5
  %s8 = scalar_select 0, %s7, %s5
  $region1: #{tpu_custom_call.1} parent=0
    #allocation2 [shape = 'u8[16384]{0}', space=vmem, size = 0x4000, scoped, tag = 'input window, operand 0, single buffered']
    #allocation3 [shape = 's32[1]{0}', space=sflag, size = 0x4, scoped, tag = 'scoped memory for tpu_custom_call.1']
    #allocation4 [shape = 's32[1]{0}', space=sflag, size = 0x4, scoped, tag = 'scoped memory for tpu_custom_call.1']
    #allocation5 [shape = 'u8[131072]{0}', space=vmem, size = 0x20000, scoped, tag = 'input window, operand 1, single buffered']
    #allocation6 [shape = 's32[1]{0}', space=sflag, size = 0x4, scoped, tag = 'scoped memory for tpu_custom_call.1']
    #allocation7 [shape = 'u8[65536]{0}', space=vmem, size = 0x10000, scoped, tag = 'input window, operand 2, single buffered']
    #allocation8 [shape = 'u8[65536]{0}', space=vmem, size = 0x10000, scoped, tag = 'input window, operand 3, single buffered']
    #allocation9 [shape = 's32[1]{0}', space=sflag, size = 0x4, scoped, tag = 'scoped memory for tpu_custom_call.1']
    #allocation10 [shape = 'u8[8192]{0}', space=vmem, size = 0x2000, scoped, tag = 'output window, operand 0, single buffered']
    %9 = vsyncpa [#allocation3], 0
    %10 = vsyncpa [#allocation6], 0
    %11 = vsyncpa [#allocation9], 0
    %12 = vsyncpa [#allocation4], 0
    // Predicated region
    $region2: #{tpu_custom_call.1} parent=1 // pred_check
      _
    $region3: #{tpu_custom_call.1} parent=1 // pred_check_branch
      %14 = sbr.rel (0) target = $region5
    $region4: #{tpu_custom_call.1} parent=1 // pred_region
      %s16 = ssub.s32 512, 512
      %17 = vsyncadd [#allocation3], %s16
      %s18 = sshll.u32 [#allocation2], 4
      %s19 = int_to_ptr.vmem [resolvable:$true] %s18
      %24 = dma.hbm_to_vmem [thread:$0]  %s0, 512, %s19, [#allocation3], 256, 256, 16
    $region5: #{tpu_custom_call.1} parent=1 // pred_fallthru
      _
    // Predicated region
    $region6: #{tpu_custom_call.1} parent=1 // pred_check
      _
    $region7: #{tpu_custom_call.1} parent=1 // pred_check_branch
      %26 = sbr.rel (0) target = $region9
    $region8: #{tpu_custom_call.1} parent=1 // pred_region
      %s28 = ssub.s32 4096, 4096
      %29 = vsyncadd [#allocation6], %s28
      %s30 = sshll.u32 [#allocation5], 4
      %s31 = int_to_ptr.vmem [resolvable:$true] %s30
      %36 = dma.hbm_to_vmem [thread:$0]  %s1, 4096, %s31, [#allocation6], 256, 256, 16
    $region9: #{tpu_custom_call.1} parent=1 // pred_fallthru
      _
    // Predicated region
    $region10: #{tpu_custom_call.1} parent=1 // pred_check
      _
    $region11: #{tpu_custom_call.1} parent=1 // pred_check_branch
      %38 = sbr.rel (0) target = $region13
    $region12: #{tpu_custom_call.1} parent=1 // pred_region
      %s40 = ssub.s32 2048, 2048
      %41 = vsyncadd [#allocation6], %s40
      %s42 = sshll.u32 [#allocation7], 4
      %s43 = int_to_ptr.vmem [resolvable:$true] %s42
      %48 = dma.hbm_to_vmem [thread:$0]  %s2, 2048, %s43, [#allocation6], 128, 128, 8
    $region13: #{tpu_custom_call.1} parent=1 // pred_fallthru
      _
    // Predicated region
    $region14: #{tpu_custom_call.1} parent=1 // pred_check
      _
    $region15: #{tpu_custom_call.1} parent=1 // pred_check_branch
      %50 = sbr.rel (0) target = $region17
    $region16: #{tpu_custom_call.1} parent=1 // pred_region
      %s52 = ssub.s32 2048, 2048
      %53 = vsyncadd [#allocation9], %s52
      %s54 = sshll.u32 [#allocation8], 4
      %s55 = int_to_ptr.vmem [resolvable:$true] %s54
      %60 = dma.hbm_to_vmem [thread:$0]  %s3, 2048, %s55, [#allocation9], 128, 128, 8
    $region17: #{tpu_custom_call.1} parent=1 // pred_fallthru
      _
    // Predicated region
    $region18: #{tpu_custom_call.1} parent=1 // pred_check
      _
    $region19: #{tpu_custom_call.1} parent=1 // pred_check_branch
      %62 = sbr.rel (0) target = $region21
    $region20: #{tpu_custom_call.1} parent=1 // pred_region
      %63 = dma.done [#allocation3], 512
    $region21: #{tpu_custom_call.1} parent=1 // pred_fallthru
      _
    // Predicated region
    $region22: #{tpu_custom_call.1} parent=1 // pred_check
      _
    $region23: #{tpu_custom_call.1} parent=1 // pred_check_branch
      %65 = sbr.rel (0) target = $region25
    $region24: #{tpu_custom_call.1} parent=1 // pred_region
      %66 = dma.done [#allocation6], 4096
    $region25: #{tpu_custom_call.1} parent=1 // pred_fallthru
      _
    // Predicated region
    $region26: #{tpu_custom_call.1} parent=1 // pred_check
      _
    $region27: #{tpu_custom_call.1} parent=1 // pred_check_branch
      %68 = sbr.rel (0) target = $region29
    $region28: #{tpu_custom_call.1} parent=1 // pred_region
      %69 = dma.done [#allocation6], 2048
    $region29: #{tpu_custom_call.1} parent=1 // pred_fallthru
      _
    // Predicated region
    $region30: #{tpu_custom_call.1} parent=1 // pred_check
      _
    $region31: #{tpu_custom_call.1} parent=1 // pred_check_branch
      %71 = sbr.rel (0) target = $region33
    $region32: #{tpu_custom_call.1} parent=1 // pred_region
      %72 = dma.done [#allocation9], 2048
    $region33: #{tpu_custom_call.1} parent=1 // pred_fallthru
      _
    %v73 = vld [vmem:[#allocation2] sm:$0xff]
    %v74 = vld [vmem:[#allocation2 + $0x8] sm:$0xff]
    %v75 = vld [vmem:[#allocation2 + $0x10] sm:$0xff]
    %v76 = vld [vmem:[#allocation2 + $0x18] sm:$0xff]
    %v77 = vld [vmem:[#allocation5] sm:$0xff]
    %v78 = vld [vmem:[#allocation5 + $0x8] sm:$0xff]
    %v79 = vld [vmem:[#allocation5 + $0x10] sm:$0xff]
    %v80 = vld [vmem:[#allocation5 + $0x18] sm:$0xff]
    %v81 = vld [vmem:[#allocation5 + $0x20] sm:$0xff]
    %v82 = vld [vmem:[#allocation5 + $0x28] sm:$0xff]
    %v83 = vld [vmem:[#allocation5 + $0x30] sm:$0xff]
    %v84 = vld [vmem:[#allocation5 + $0x38] sm:$0xff]
    %v85 = vld [vmem:[#allocation5 + $0x40] sm:$0xff]
    %v86 = vld [vmem:[#allocation5 + $0x48] sm:$0xff]
    %v87 = vld [vmem:[#allocation5 + $0x50] sm:$0xff]
    %v88 = vld [vmem:[#allocation5 + $0x58] sm:$0xff]
    %v89 = vld [vmem:[#allocation5 + $0x60] sm:$0xff]
    %v90 = vld [vmem:[#allocation5 + $0x68] sm:$0xff]
    %v91 = vld [vmem:[#allocation5 + $0x70] sm:$0xff]
    %v92 = vld [vmem:[#allocation5 + $0x78] sm:$0xff]
    %v93 = vld [vmem:[#allocation5 + $0x80] sm:$0xff]
    %v94 = vld [vmem:[#allocation5 + $0x88] sm:$0xff]
    %v95 = vld [vmem:[#allocation5 + $0x90] sm:$0xff]
    %v96 = vld [vmem:[#allocation5 + $0x98] sm:$0xff]
    %v97 = vld [vmem:[#allocation5 + $0xa0] sm:$0xff]
    %v98 = vld [vmem:[#allocation5 + $0xa8] sm:$0xff]
    %v99 = vld [vmem:[#allocation5 + $0xb0] sm:$0xff]
    %v100 = vld [vmem:[#allocation5 + $0xb8] sm:$0xff]
    %v101 = vld [vmem:[#allocation5 + $0xc0] sm:$0xff]
    %v102 = vld [vmem:[#allocation5 + $0xc8] sm:$0xff]
    %v103 = vld [vmem:[#allocation5 + $0xd0] sm:$0xff]
    %v104 = vld [vmem:[#allocation5 + $0xd8] sm:$0xff]
    %v105 = vld [vmem:[#allocation5 + $0xe0] sm:$0xff]
    %v106 = vld [vmem:[#allocation5 + $0xe8] sm:$0xff]
    %v107 = vld [vmem:[#allocation5 + $0xf0] sm:$0xff]
    %v108 = vld [vmem:[#allocation5 + $0xf8] sm:$0xff]
    %109 = vmatprep.subr.mxu0 %v78
    %110 = vmatpush1.xpose.msra.mxu0 %v77
    %111 = vmatprep.subr.mxu0 %v80
    %112 = vmatpush1.xpose.msra.mxu0 %v79
    %113 = vmatprep.subr.mxu0 %v82
    %114 = vmatpush1.xpose.msra.mxu0 %v81
    %115 = vmatprep.subr.mxu0 %v84
    %116 = vmatpush1.xpose.msra.mxu0 %v83
    %117 = vmatprep.subr.mxu0 %v86
    %118 = vmatpush1.xpose.msra.mxu0 %v85
    %119 = vmatprep.subr.mxu0 %v88
    %120 = vmatpush1.xpose.msra.mxu0 %v87
    %121 = vmatprep.subr.mxu0 %v90
    %122 = vmatpush1.xpose.msra.mxu0 %v89
    %123 = vmatprep.subr.mxu0 %v92
    %124 = vmatpush1.xpose.msra.mxu0 %v91
    %125 = vmatprep.subr.mxu0 %v94
    %126 = vmatpush1.xpose.msra.mxu0 %v93
    %127 = vmatprep.subr.mxu0 %v96
    %128 = vmatpush1.xpose.msra.mxu0 %v95
    %129 = vmatprep.subr.mxu0 %v98
    %130 = vmatpush1.xpose.msra.mxu0 %v97
    %131 = vmatprep.subr.mxu0 %v100
    %132 = vmatpush1.xpose.msra.mxu0 %v99
    %133 = vmatprep.subr.mxu0 %v102
    %134 = vmatpush1.xpose.msra.mxu0 %v101
    %135 = vmatprep.subr.mxu0 %v104
    %136 = vmatpush1.xpose.msra.mxu0 %v103
    %137 = vmatprep.subr.mxu0 %v106
    %138 = vmatpush1.xpose.msra.mxu0 %v105
    %139 = vmatprep.subr.mxu0 %v108
    %140 = vmatpush1.xpose.msra.mxu0 %v107
    %141 = vmatprep.subr.mxu0 0.0
    %142 = vmatpush1.xpose.msra.mxu0 0.0
    %143 = vmatprep.subr.mxu0 0.0
    %144 = vmatpush1.xpose.msra.mxu0 0.0
    %145 = vmatprep.subr.mxu0 0.0
    %146 = vmatpush1.xpose.msra.mxu0 0.0
    %147 = vmatprep.subr.mxu0 0.0
    %148 = vmatpush1.xpose.msra.mxu0 0.0
    %149 = vmatprep.subr.mxu0 0.0
    %150 = vmatpush1.xpose.msra.mxu0 0.0
    %151 = vmatprep.subr.mxu0 0.0
    %152 = vmatpush1.xpose.msra.mxu0 0.0
    %153 = vmatprep.subr.mxu0 0.0
    %154 = vmatpush1.xpose.msra.mxu0 0.0
    %155 = vmatprep.subr.mxu0 0.0
    %156 = vmatpush1.xpose.msra.mxu0 0.0
    %157 = vmatprep.subr.mxu0 0.0
    %158 = vmatpush1.xpose.msra.mxu0 0.0
    %159 = vmatprep.subr.mxu0 0.0
    %160 = vmatpush1.xpose.msra.mxu0 0.0
    %161 = vmatprep.subr.mxu0 0.0
    %162 = vmatpush1.xpose.msra.mxu0 0.0
    %163 = vmatprep.subr.mxu0 0.0
    %164 = vmatpush1.xpose.msra.mxu0 0.0
    %165 = vmatprep.subr.mxu0 0.0
    %166 = vmatpush1.xpose.msra.mxu0 0.0
    %167 = vmatprep.subr.mxu0 0.0
    %168 = vmatpush1.xpose.msra.mxu0 0.0
    %169 = vmatprep.subr.mxu0 0.0
    %170 = vmatpush1.xpose.msra.mxu0 0.0
    %171 = vmatprep.subr.mxu0 0.0
    %172 = vmatpush1.xpose.msra.mxu0 0.0
    %173 = vmatprep.mubr.f32.mxu0 %v74
    %174 = vmatmul.mubr.f32.gmra.mrb[0].mxu0 %v73
    %v175 = vpop.f32.mrb[0].mxu0
    %v176 = vadd.f32 0.0, %v175
    %v177 = vpop.f32.mrb[0].mxu0
    %178 = vmatprep.mubr.f32.mxu0 %v76
    %179 = vmatmul.mubr.f32.gmra.mrb[0].mxu0 %v75
    %v180 = vpop.f32.mrb[0].mxu0
    %v181 = vadd.f32 0.0, %v180
    %v182 = vpop.f32.mrb[0].mxu0
    %183 = vdwg.mxu0
    %v184 = vld [vmem:[#allocation7] sm:$0xff]
    %v185 = vld [vmem:[#allocation7 + $0x8] sm:$0xff]
    %v186 = vld [vmem:[#allocation7 + $0x10] sm:$0xff]
    %v187 = vld [vmem:[#allocation7 + $0x18] sm:$0xff]
    %v188 = vld [vmem:[#allocation7 + $0x20] sm:$0xff]
    %v189 = vld [vmem:[#allocation7 + $0x28] sm:$0xff]
    %v190 = vld [vmem:[#allocation7 + $0x30] sm:$0xff]
    %v191 = vld [vmem:[#allocation7 + $0x38] sm:$0xff]
    %v192 = vld [vmem:[#allocation7 + $0x40] sm:$0xff]
    %v193 = vld [vmem:[#allocation7 + $0x48] sm:$0xff]
    %v194 = vld [vmem:[#allocation7 + $0x50] sm:$0xff]
    %v195 = vld [vmem:[#allocation7 + $0x58] sm:$0xff]
    %v196 = vld [vmem:[#allocation7 + $0x60] sm:$0xff]
    %v197 = vld [vmem:[#allocation7 + $0x68] sm:$0xff]
    %v198 = vld [vmem:[#allocation7 + $0x70] sm:$0xff]
    %v199 = vld [vmem:[#allocation7 + $0x78] sm:$0xff]
    %200 = vmatprep.subr.mxu0 0.0
    %201 = vmatpush1.xpose.msra.mxu0 %v184
    %202 = vmatprep.subr.mxu0 0.0
    %203 = vmatpush1.xpose.msra.mxu0 %v185
    %204 = vmatprep.subr.mxu0 0.0
    %205 = vmatpush1.xpose.msra.mxu0 %v186
    %206 = vmatprep.subr.mxu0 0.0
    %207 = vmatpush1.xpose.msra.mxu0 %v187
    %208 = vmatprep.subr.mxu0 0.0
    %209 = vmatpush1.xpose.msra.mxu0 %v188
    %210 = vmatprep.subr.mxu0 0.0
    %211 = vmatpush1.xpose.msra.mxu0 %v189
    %212 = vmatprep.subr.mxu0 0.0
    %213 = vmatpush1.xpose.msra.mxu0 %v190
    %214 = vmatprep.subr.mxu0 0.0
    %215 = vmatpush1.xpose.msra.mxu0 %v191
    %216 = vmatprep.subr.mxu0 0.0
    %217 = vmatpush1.xpose.msra.mxu0 %v192
    %218 = vmatprep.subr.mxu0 0.0
    %219 = vmatpush1.xpose.msra.mxu0 %v193
    %220 = vmatprep.subr.mxu0 0.0
    %221 = vmatpush1.xpose.msra.mxu0 %v194
    %222 = vmatprep.subr.mxu0 0.0
    %223 = vmatpush1.xpose.msra.mxu0 %v195
    %224 = vmatprep.subr.mxu0 0.0
    %225 = vmatpush1.xpose.msra.mxu0 %v196
    %226 = vmatprep.subr.mxu0 0.0
    %227 = vmatpush1.xpose.msra.mxu0 %v197
    %228 = vmatprep.subr.mxu0 0.0
    %229 = vmatpush1.xpose.msra.mxu0 %v198
    %230 = vmatprep.subr.mxu0 0.0
    %231 = vmatpush1.xpose.msra.mxu0 %v199
    %232 = vmatprep.subr.mxu0 0.0
    %233 = vmatpush1.xpose.msra.mxu0 0.0
    %234 = vmatprep.subr.mxu0 0.0
    %235 = vmatpush1.xpose.msra.mxu0 0.0
    %236 = vmatprep.subr.mxu0 0.0
    %237 = vmatpush1.xpose.msra.mxu0 0.0
    %238 = vmatprep.subr.mxu0 0.0
    %239 = vmatpush1.xpose.msra.mxu0 0.0
    %240 = vmatprep.subr.mxu0 0.0
    %241 = vmatpush1.xpose.msra.mxu0 0.0
    %242 = vmatprep.subr.mxu0 0.0
    %243 = vmatpush1.xpose.msra.mxu0 0.0
    %244 = vmatprep.subr.mxu0 0.0
    %245 = vmatpush1.xpose.msra.mxu0 0.0
    %246 = vmatprep.subr.mxu0 0.0
    %247 = vmatpush1.xpose.msra.mxu0 0.0
    %248 = vmatprep.subr.mxu0 0.0
    %249 = vmatpush1.xpose.msra.mxu0 0.0
    %250 = vmatprep.subr.mxu0 0.0
    %251 = vmatpush1.xpose.msra.mxu0 0.0
    %252 = vmatprep.subr.mxu0 0.0
    %253 = vmatpush1.xpose.msra.mxu0 0.0
    %254 = vmatprep.subr.mxu0 0.0
    %255 = vmatpush1.xpose.msra.mxu0 0.0
    %256 = vmatprep.subr.mxu0 0.0
    %257 = vmatpush1.xpose.msra.mxu0 0.0
    %258 = vmatprep.subr.mxu0 0.0
    %259 = vmatpush1.xpose.msra.mxu0 0.0
    %260 = vmatprep.subr.mxu0 0.0
    %261 = vmatpush1.xpose.msra.mxu0 0.0
    %262 = vmatprep.subr.mxu0 0.0
    %263 = vmatpush1.xpose.msra.mxu0 0.0
    %264 = vmatprep.mubr.f32.mxu0 0.0
    %265 = vmatmul.mubr.f32.gmra.mrb[0].mxu0 %v176
    %v266 = vpop.f32.mrb[0].mxu0
    %v267 = vadd.f32 0.0, %v266
    %v268 = vpop.f32.mrb[0].mxu0
    %269 = vmatprep.mubr.f32.mxu0 0.0
    %270 = vmatmul.mubr.f32.gmra.mrb[0].mxu0 %v181
    %v271 = vpop.f32.mrb[0].mxu0
    %v272 = vadd.f32 0.0, %v271
    %v273 = vpop.f32.mrb[0].mxu0
    %274 = vdwg.mxu0
    %v275 = vld [vmem:[#allocation8] sm:$0xff]
    %v276 = vld [vmem:[#allocation8 + $0x8] sm:$0xff]
    %v277 = vld [vmem:[#allocation8 + $0x10] sm:$0xff]
    %v278 = vld [vmem:[#allocation8 + $0x18] sm:$0xff]
    %v279 = vld [vmem:[#allocation8 + $0x20] sm:$0xff]
    %v280 = vld [vmem:[#allocation8 + $0x28] sm:$0xff]
    %v281 = vld [vmem:[#allocation8 + $0x30] sm:$0xff]
    %v282 = vld [vmem:[#allocation8 + $0x38] sm:$0xff]
    %v283 = vld [vmem:[#allocation8 + $0x40] sm:$0xff]
    %v284 = vld [vmem:[#allocation8 + $0x48] sm:$0xff]
    %v285 = vld [vmem:[#allocation8 + $0x50] sm:$0xff]
    %v286 = vld [vmem:[#allocation8 + $0x58] sm:$0xff]
    %v287 = vld [vmem:[#allocation8 + $0x60] sm:$0xff]
    %v288 = vld [vmem:[#allocation8 + $0x68] sm:$0xff]
    %v289 = vld [vmem:[#allocation8 + $0x70] sm:$0xff]
    %v290 = vld [vmem:[#allocation8 + $0x78] sm:$0xff]
    %291 = vmatprep.subr.mxu0 0.0
    %292 = vmatpush1.xpose.msra.mxu0 %v275
    %293 = vmatprep.subr.mxu0 0.0
    %294 = vmatpush1.xpose.msra.mxu0 %v276
    %295 = vmatprep.subr.mxu0 0.0
    %296 = vmatpush1.xpose.msra.mxu0 %v277
    %297 = vmatprep.subr.mxu0 0.0
    %298 = vmatpush1.xpose.msra.mxu0 %v278
    %299 = vmatprep.subr.mxu0 0.0
    %300 = vmatpush1.xpose.msra.mxu0 %v279
    %301 = vmatprep.subr.mxu0 0.0
    %302 = vmatpush1.xpose.msra.mxu0 %v280
    %303 = vmatprep.subr.mxu0 0.0
    %304 = vmatpush1.xpose.msra.mxu0 %v281
    %305 = vmatprep.subr.mxu0 0.0
    %306 = vmatpush1.xpose.msra.mxu0 %v282
    %307 = vmatprep.subr.mxu0 0.0
    %308 = vmatpush1.xpose.msra.mxu0 %v283
    %309 = vmatprep.subr.mxu0 0.0
    %310 = vmatpush1.xpose.msra.mxu0 %v284
    %311 = vmatprep.subr.mxu0 0.0
    %312 = vmatpush1.xpose.msra.mxu0 %v285
    %313 = vmatprep.subr.mxu0 0.0
    %314 = vmatpush1.xpose.msra.mxu0 %v286
    %315 = vmatprep.subr.mxu0 0.0
    %316 = vmatpush1.xpose.msra.mxu0 %v287
    %317 = vmatprep.subr.mxu0 0.0
    %318 = vmatpush1.xpose.msra.mxu0 %v288
    %319 = vmatprep.subr.mxu0 0.0
    %320 = vmatpush1.xpose.msra.mxu0 %v289
    %321 = vmatprep.subr.mxu0 0.0
    %322 = vmatpush1.xpose.msra.mxu0 %v290
    %323 = vmatprep.subr.mxu0 0.0
    %324 = vmatpush1.xpose.msra.mxu0 0.0
    %325 = vmatprep.subr.mxu0 0.0
    %326 = vmatpush1.xpose.msra.mxu0 0.0
    %327 = vmatprep.subr.mxu0 0.0
    %328 = vmatpush1.xpose.msra.mxu0 0.0
    %329 = vmatprep.subr.mxu0 0.0
    %330 = vmatpush1.xpose.msra.mxu0 0.0
    %331 = vmatprep.subr.mxu0 0.0
    %332 = vmatpush1.xpose.msra.mxu0 0.0
    %333 = vmatprep.subr.mxu0 0.0
    %334 = vmatpush1.xpose.msra.mxu0 0.0
    %335 = vmatprep.subr.mxu0 0.0
    %336 = vmatpush1.xpose.msra.mxu0 0.0
    %337 = vmatprep.subr.mxu0 0.0
    %338 = vmatpush1.xpose.msra.mxu0 0.0
    %339 = vmatprep.subr.mxu0 0.0
    %340 = vmatpush1.xpose.msra.mxu0 0.0
    %341 = vmatprep.subr.mxu0 0.0
    %342 = vmatpush1.xpose.msra.mxu0 0.0
    %343 = vmatprep.subr.mxu0 0.0
    %344 = vmatpush1.xpose.msra.mxu0 0.0
    %345 = vmatprep.subr.mxu0 0.0
    %346 = vmatpush1.xpose.msra.mxu0 0.0
    %347 = vmatprep.subr.mxu0 0.0
    %348 = vmatpush1.xpose.msra.mxu0 0.0
    %349 = vmatprep.subr.mxu0 0.0
    %350 = vmatpush1.xpose.msra.mxu0 0.0
    %351 = vmatprep.subr.mxu0 0.0
    %352 = vmatpush1.xpose.msra.mxu0 0.0
    %353 = vmatprep.subr.mxu0 0.0
    %354 = vmatpush1.xpose.msra.mxu0 0.0
    %355 = vmatprep.mubr.f32.mxu0 0.0
    %356 = vmatmul.mubr.f32.gmra.mrb[0].mxu0 %v267
    %v357 = vpop.f32.mrb[0].mxu0
    %v358 = vadd.f32 0.0, %v357
    %v359 = vpop.f32.mrb[0].mxu0
    %360 = vmatprep.mubr.f32.mxu0 0.0
    %361 = vmatmul.mubr.f32.gmra.mrb[0].mxu0 %v272
    %v362 = vpop.f32.mrb[0].mxu0
    %v363 = vadd.f32 0.0, %v362
    %v364 = vpop.f32.mrb[0].mxu0
    %365 = vdwg.mxu0
    %366 = vst [vmem:[#allocation10] sm:$0xff] %v358
    %367 = vst [vmem:[#allocation10 + $0x8] sm:$0xff] %v363
    // Predicated region
    $region34: #{tpu_custom_call.1} parent=1 // pred_check
      _
    $region35: #{tpu_custom_call.1} parent=1 // pred_check_branch
      %369 = sbr.rel (0) target = $region37
    $region36: #{tpu_custom_call.1} parent=1 // pred_region
      %s371 = ssub.s32 256, 256
      %372 = vsyncadd [#allocation4], %s371
      %s373 = sshll.u32 [#allocation10], 4
      %s374 = int_to_ptr.vmem [resolvable:$true] %s373
      %379 = dma.vmem_to_hbm [thread:$0]  %s374, 256, %s4, [#allocation4], 128, 128, 8
    $region37: #{tpu_custom_call.1} parent=1 // pred_fallthru
      _
    // Predicated region
    $region38: #{tpu_custom_call.1} parent=1 // pred_check
      _
    $region39: #{tpu_custom_call.1} parent=1 // pred_check_branch
      %381 = sbr.rel (0) target = $region41
    $region40: #{tpu_custom_call.1} parent=1 // pred_region
      %382 = dma.done [#allocation4], 256
    $region41: #{tpu_custom_call.1} parent=1 // pred_fallthru
      _
    %383 = vsyncpa [#allocation3], 1
    %384 = vsyncpa [#allocation6], 1
    %385 = vsyncpa [#allocation9], 1
    %386 = vsyncpa [#allocation4], 1

</llo_original>
